<compile_context>
chip_gen: v5e
topology: v5e:2x2
jax: 0.10.0
libtpu: 0.0.40
codegen_flags: <defaults>
</compile_context>

<pallas_src>
import functools

import jax
import jax.numpy as jnp
from jax.experimental import pallas as pl
from jax.experimental.pallas import tpu as pltpu


def _round_up(x, m):
    return -(-x // m) * m


def _accuracy_kernel(x_ref, t_ref, o_ref, *, n_total):
    """One grid step over a natural-layout (tile_m, C) block of logits.

    x_ref : (tile_m, C) logits block, native dtype (bf16 stays bf16)
    t_ref : (tile_m, 1) integer target block, native dtype
    o_ref : (1, 1) int32 per-program partial count of correct predictions
    """
    i = pl.program_id(0)
    last = pl.num_programs(0) - 1

    x = x_ref[...]
    if x.dtype not in (jnp.float32, jnp.bfloat16):
        x = x.astype(jnp.float32)           # exact widening -> ties preserved
    t = t_ref[...].astype(jnp.int32)        # (tile_m, 1)
    tm, c = x.shape

    # First-occurrence argmax along the (tiny, full-extent) class/lane axis.
    row_max = jnp.max(x, axis=1, keepdims=True)                    # (tm, 1)
    cls_iota = jax.lax.broadcasted_iota(jnp.int32, x.shape, 1)     # (tm, C)
    pred = jnp.min(jnp.where(x == row_max, cls_iota, c),
                   axis=1, keepdims=True)                          # (tm, 1)

    correct = pred == t                                            # (tm, 1) bool

    @pl.when(i != last)
    def _():
        # Full tiles: no validity mask needed.
        o_ref[...] = jnp.sum(correct.astype(jnp.int32), keepdims=True)

    @pl.when(i == last)
    def _():
        # Only the (possibly ragged) tail tile pays for the row-validity mask.
        row = jax.lax.broadcasted_iota(jnp.int32, (tm, 1), 0)
        valid = (i * tm + row) < n_total
        o_ref[...] = jnp.sum(
            jnp.logical_and(correct, valid).astype(jnp.int32), keepdims=True)


_MIN_SPLIT_ROWS = 4096        # batches this big get >= 2 tiles (v7x: 2 TCs)
_VMEM_BUDGET = 40 << 20       # double-buffered block budget (fits v7x 64 MiB)


def accuracy(logits, target, *, reduction="mean", max_tile_rows=16384):
    """Pallas equivalent of Accuracy(reduction, nlabels>1).forward(logits, target).

    logits: (N, C) float array, kept in its HBM dtype (f32 or bf16)
    target: (N,)   integer array, kept in its HBM dtype
    """
    logits = jnp.asarray(logits)
    target = jnp.asarray(target)
    n, c = logits.shape

    if c == 1:
        # TODO(synk): nlabels==1 sigmoid-threshold branch not implemented.
        raise NotImplementedError("nlabels==1 (threshold) path is not implemented")
    if reduction not in ("mean", "sum"):
        # TODO(synk): reduction='none' (raw boolean tensor) path not implemented.
        raise NotImplementedError(f"unsupported reduction: {reduction!r}")

    # Keep target in its native small integer dtype (no wrapper cast -> no
    # extra N-element HBM round trip); only widen exotic dtypes.
    if target.dtype not in (jnp.int8, jnp.int16, jnp.int32,
                            jnp.uint8, jnp.uint16, jnp.uint32):
        target = target.astype(jnp.int32)
    target_2d = target.reshape(n, 1)          # free: trailing unit dim, no copy

    logit_bytes = jnp.dtype(logits.dtype).itemsize
    tgt_bytes = jnp.dtype(target.dtype).itemsize

    # ---- tile selection (rows of the natural (N, C) layout) ---------------
    # VMEM cost per row is dominated by lane padding (C and 1 both pad to 128
    # lanes), so cap the tile by a VMEM budget first, then by max_tile_rows.
    assert max_tile_rows % 8 == 0, "max_tile_rows must be a multiple of 8"
    bytes_per_row = 2 * 128 * (logit_bytes + tgt_bytes)   # double-buffered
    vmem_cap_rows = max(1024, ((_VMEM_BUDGET // bytes_per_row) // 8) * 8)
    cap = min(max_tile_rows, vmem_cap_rows)

    if n > cap:
        tile_m = cap
    elif n >= _MIN_SPLIT_ROWS:
        tile_m = _round_up(pl.cdiv(n, 2), 8)   # >= 2 tiles for v7x's two cores
    else:
        tile_m = n                             # single full-extent tile
    grid_n = pl.cdiv(n, tile_m)

    padded_rows = _round_up(tile_m, 16)
    vmem_limit = int(max(padded_rows * bytes_per_row + (1 << 20), 16 << 20))

    kernel = functools.partial(_accuracy_kernel, n_total=n)

    partials = pl.pallas_call(
        kernel,
        out_shape=jax.ShapeDtypeStruct((grid_n, 1), jnp.int32),
        grid_spec=pltpu.PrefetchScalarGridSpec(
            num_scalar_prefetch=0,
            grid=(grid_n,),
            in_specs=[
                pl.BlockSpec((tile_m, c), lambda i: (i, 0)),   # natural logits rows
                pl.BlockSpec((tile_m, 1), lambda i: (i, 0)),   # matching target rows
            ],
            out_specs=pl.BlockSpec((1, 1), lambda i: (i, 0)),  # per-program partial
        ),
        compiler_params=pltpu.CompilerParams(
            dimension_semantics=("parallel",),                 # v7x: 2 TCs share grid
            vmem_limit_bytes=vmem_limit),
        cost_estimate=pl.CostEstimate(
            flops=n * c,
            transcendentals=0,
            bytes_accessed=n * c * logit_bytes + n * tgt_bytes + grid_n * 4),
    )(logits, target_2d)

    total = jnp.sum(partials).astype(jnp.float32)              # exact int32 count
    if reduction == "mean":
        return total / jnp.float32(n)
    return total                                               # reduction == "sum"


if __name__ == "__main__":
    key = jax.random.PRNGKey(0)
    k1, k2, k3, k4 = jax.random.split(key, 4)

    # Small default-config case: N=8, C=5 (single full-extent tile).
    N, NLABELS = 8, 5
    logits = jax.random.normal(k1, (N, NLABELS), dtype=jnp.float32)
    target = jax.random.randint(k2, (N,), 0, NLABELS, dtype=jnp.int32)

    acc = jax.block_until_ready(accuracy(logits, target, reduction="mean"))
    ref = jnp.mean((jnp.argmax(logits, axis=1) == target).astype(jnp.float32))
    assert jnp.allclose(acc, ref, atol=1e-6), (acc, ref)

    acc_sum = jax.block_until_ready(accuracy(logits, target, reduction="sum"))
    ref_sum = jnp.sum((jnp.argmax(logits, axis=1) == target).astype(jnp.float32))
    assert jnp.allclose(acc_sum, ref_sum, atol=1e-6), (acc_sum, ref_sum)

    # Multi-tile + ragged-tail-mask path, bf16 logits kept bf16 end-to-end.
    N2 = 300
    logits2 = jax.random.normal(k3, (N2, NLABELS), dtype=jnp.bfloat16)
    target2 = jax.random.randint(k4, (N2,), 0, NLABELS, dtype=jnp.int32)
    acc2 = jax.block_until_ready(accuracy(logits2, target2, max_tile_rows=128))
    ref2 = jnp.mean((jnp.argmax(logits2, axis=1) == target2).astype(jnp.float32))
    assert jnp.allclose(acc2, ref2, atol=1e-6), (acc2, ref2)

    print("KERNEL_OK")
</pallas_src>

<mosaic_0001>
module attributes {stable_mosaic.version = 11 : i64} {
  func.func @_accuracy_kernel(%arg0: i32, %arg1: memref<8x5xf32, #tpu.memory_space<vmem>>, %arg2: memref<8x1xi32, #tpu.memory_space<vmem>>, %arg3: memref<1x1xi32, #tpu.memory_space<vmem>>) attributes {dimension_semantics = [#tpu.dimension_semantics<parallel>], iteration_bounds = array<i64: 1>, scalar_prefetch = 0 : i64, scratch_operands = 0 : i64, tpu.core_type = #tpu.core_type<tc>, window_params = [{transform_indices = @transform_0, window_bounds = array<i64: 8, 5>}, {transform_indices = @transform_1, window_bounds = array<i64: 8, 1>}, {transform_indices = @transform_2, window_bounds = array<i64: 1, 1>}]} {
    %c0 = arith.constant 0 : index
    %c0_0 = arith.constant 0 : index
    %0 = vector.load %arg1[%c0, %c0_0] : memref<8x5xf32, #tpu.memory_space<vmem>>, vector<8x5xf32>
    %c0_1 = arith.constant 0 : index
    %c0_2 = arith.constant 0 : index
    %1 = vector.load %arg2[%c0_1, %c0_2] : memref<8x1xi32, #tpu.memory_space<vmem>>, vector<8x1xi32>
    %cst = arith.constant dense<0xFF800000> : vector<8xf32>
    %2 = vector.multi_reduction <maximumf>, %0, %cst [1] : vector<8x5xf32> to vector<8xf32>
    %3 = vector.shape_cast %2 : vector<8xf32> to vector<8x1xf32>
    %4 = tpu.iota {dimensions = array<i32: 1>} : vector<8x5xi32>
    %5 = vector.broadcast %3 : vector<8x1xf32> to vector<8x5xf32>
    %6 = arith.cmpf oeq, %0, %5 : vector<8x5xf32>
    %c5_i32 = arith.constant 5 : i32
    %7 = vector.broadcast %c5_i32 : i32 to vector<8x5xi32>
    %8 = arith.select %6, %4, %7 : vector<8x5xi1>, vector<8x5xi32>
    %cst_3 = arith.constant dense<2147483647> : vector<8xi32>
    %9 = vector.multi_reduction <minsi>, %8, %cst_3 [1] : vector<8x5xi32> to vector<8xi32>
    %10 = vector.shape_cast %9 : vector<8xi32> to vector<8x1xi32>
    %11 = arith.cmpi eq, %10, %1 : vector<8x1xi32>
    %c0_i32 = arith.constant 0 : i32
    %12 = arith.cmpi ne, %arg0, %c0_i32 : i32
    %13 = arith.extui %12 : i1 to i32
    %c0_i32_4 = arith.constant 0 : i32
    %14 = arith.cmpi ne, %13, %c0_i32_4 : i32
    scf.if %14 {
      %18 = arith.extui %11 : vector<8x1xi1> to vector<8x1xi32>
      %19 = vector.shape_cast %18 : vector<8x1xi32> to vector<1x8x1xi32>
      %cst_7 = arith.constant dense<0> : vector<1xi32>
      %20 = vector.multi_reduction <add>, %19, %cst_7 [1, 2] : vector<1x8x1xi32> to vector<1xi32>
      %21 = vector.shape_cast %20 : vector<1xi32> to vector<1x1x1xi32>
      %22 = vector.extract %21[0, 0, 0] : i32 from vector<1x1x1xi32>
      %23 = vector.broadcast %22 : i32 to vector<1x1xi32>
      %c0_8 = arith.constant 0 : index
      %c0_9 = arith.constant 0 : index
      %24 = vector.load %arg3[%c0_8, %c0_9] : memref<1x1xi32, #tpu.memory_space<vmem>>, vector<1x1xi32>
      tpu.vector_store %arg3[%c0_8, %c0_9], %23 {strides = array<i32>} : memref<1x1xi32, #tpu.memory_space<vmem>>, vector<1x1xi32>,
    } else {
    }
    %c0_i32_5 = arith.constant 0 : i32
    %15 = arith.cmpi eq, %arg0, %c0_i32_5 : i32
    %16 = arith.extui %15 : i1 to i32
    %c0_i32_6 = arith.constant 0 : i32
    %17 = arith.cmpi ne, %16, %c0_i32_6 : i32
    scf.if %17 {
      %18 = tpu.iota {dimensions = array<i32: 0>} : vector<8x1xi32>
      %c8_i32 = arith.constant 8 : i32
      %19 = arith.muli %arg0, %c8_i32 : i32
      %20 = vector.broadcast %19 : i32 to vector<8x1xi32>
      %21 = arith.addi %20, %18 : vector<8x1xi32>
      %c8_i32_7 = arith.constant 8 : i32
      %22 = vector.broadcast %c8_i32_7 : i32 to vector<8x1xi32>
      %23 = arith.cmpi slt, %21, %22 : vector<8x1xi32>
      %24 = arith.andi %11, %23 : vector<8x1xi1>
      %25 = arith.extui %24 : vector<8x1xi1> to vector<8x1xi32>
      %26 = vector.shape_cast %25 : vector<8x1xi32> to vector<1x8x1xi32>
      %cst_8 = arith.constant dense<0> : vector<1xi32>
      %27 = vector.multi_reduction <add>, %26, %cst_8 [1, 2] : vector<1x8x1xi32> to vector<1xi32>
      %28 = vector.shape_cast %27 : vector<1xi32> to vector<1x1x1xi32>
      %29 = vector.extract %28[0, 0, 0] : i32 from vector<1x1x1xi32>
      %30 = vector.broadcast %29 : i32 to vector<1x1xi32>
      %c0_9 = arith.constant 0 : index
      %c0_10 = arith.constant 0 : index
      %31 = vector.load %arg3[%c0_9, %c0_10] : memref<1x1xi32, #tpu.memory_space<vmem>>, vector<1x1xi32>
      tpu.vector_store %arg3[%c0_9, %c0_10], %30 {strides = array<i32>} : memref<1x1xi32, #tpu.memory_space<vmem>>, vector<1x1xi32>,
    } else {
    }
    return
  }
  func.func @transform_0(%arg0: i32) -> (i32, i32) {
    %c0_i32 = arith.constant 0 : i32
    %c0_i32_0 = arith.constant 0 : i32
    return %arg0, %c0_i32 : i32, i32
  }
  func.func @transform_1(%arg0: i32) -> (i32, i32) {
    %c0_i32 = arith.constant 0 : i32
    %c0_i32_0 = arith.constant 0 : i32
    return %arg0, %c0_i32 : i32, i32
  }
  func.func @transform_2(%arg0: i32) -> (i32, i32) {
    %c0_i32 = arith.constant 0 : i32
    %c0_i32_0 = arith.constant 0 : i32
    return %arg0, %c0_i32 : i32, i32
  }
}

</mosaic_0001>

<llo_original>
// kernel: tpu_custom_call.1
$region0: #{tpu_custom_call.1}
  #allocation0 [shape = 'u32[]', space=smem, size = 0x4, offset = 0x4, fixed_abs, tag = 'smem constant byte address 0x4 - core index']
  #allocation1 [shape = 'u32[72,128]{1,0:T(1,128)}', space=vmem, size = 0x9000, scoped, tag = 'internal scratch']
  %s0 = inlined_call_operand.vmem [shape: f32[8,5], index: 0, kind: input, shape index: {}]
  %s1 = inlined_call_operand.vmem [shape: s32[8,1], index: 1, kind: input, shape index: {}]
  %s2 = inlined_call_operand.hbm [shape: s32[1,1], index: 2, kind: output, shape index: {}]
  %s3 = sld [smem:[#allocation0]]
  $region26: #{tpu_custom_call.1} parent=0
    _
  %s5 = ssub.s32 1, %s3
  %s6 = scalar_select 0, %s5, %s3
  $region1: #{tpu_custom_call.1} parent=0
    #allocation2 [shape = 'u8[512]{0}', space=vmem, size = 0x400, scoped, tag = 'output window, operand 0, single buffered']
    #allocation3 [shape = 's32[1]{0}', space=sflag, size = 0x4, scoped, tag = 'scoped memory for tpu_custom_call.1']
    %7 = vsyncpa [#allocation3], 0
    // Predicated region
    $region2: #{tpu_custom_call.1} parent=1 // pred_check
      _
    $region3: #{tpu_custom_call.1} parent=1 // pred_check_branch
      %9 = sbr.rel (0) target = $region5
    $region4: #{tpu_custom_call.1} parent=1 // pred_region
      _
    $region5: #{tpu_custom_call.1} parent=1 // pred_fallthru
      _
    // Predicated region
    $region6: #{tpu_custom_call.1} parent=1 // pred_check
      _
    $region7: #{tpu_custom_call.1} parent=1 // pred_check_branch
      %11 = sbr.rel (0) target = $region9
    $region8: #{tpu_custom_call.1} parent=1 // pred_region
      _
    $region9: #{tpu_custom_call.1} parent=1 // pred_fallthru
      _
    %v12 = vld [vmem:[%s0] sm:$0xff]
    %v13 = vld [vmem:[%s1] sm:$0xff]
    %vm14 = vcmask 39936
    %v15 = vsel %vm14, %v12, -inf
    %16 = vmax.xlane.f32.xlu0 %v15
    %v17 = vpop.xlane.xlu0 %16
    %v18 = vlaneseq
    %v19 = vand.u32 %v18, 127
    %vm20 = vcmp.eq.f32.partialorder %v12, %v17
    %v21 = vsel %vm20, %v19, 5
    %v22 = vsel %vm14, %v21, 2147483647
    %v23 = vand.u32 %v22, 65535
    %v24 = vshra.s32 %v22, 16
    %v25 = vcvt.s32.f32 %v23
    %v26 = vcvt.s32.f32 %v24
    %27 = vmin.xlane.f32.xlu0 %v26
    %v28 = vpop.xlane.xlu0 %27
    %vm29 = vcmp.eq.f32.partialorder %v26, %v28
    %v30 = vsel %vm29, %v25, inf
    %31 = vmin.xlane.f32.xlu0 %v30
    %v32 = vpop.xlane.xlu0 %31
    %v33 = vcvt.f32.s32 %v32
    %v34 = vcvt.f32.s32 %v28
    %v35 = vshll.u32 %v34, 16
    %v36 = vadd.s32 %v35, %v33
    %vm37 = vcmp.eq.s32.totalorder %v36, %v13
    %p38 = scmp.ne.s32.totalorder 0, 0
    // Predicated region
    $region10: #{tpu_custom_call.1} parent=1 // pred_check
      %p39 = pneg %p38
    $region11: #{tpu_custom_call.1} parent=1 // pred_check_branch
      %41 = sbr.rel (%p39) target = $region13
    $region12: #{tpu_custom_call.1} parent=1 // pred_region
      %v42 = vsel %vm37, 1, 0
      %vm43 = vcmask 7168
      %v44 = vsel %vm43, %v42, 0
      %v45 = vand.u32 %v44, 65535
      %v46 = vshrl.u32 %v44, 16
      %v47 = vcvt.s32.f32 %v45
      %v48 = vcvt.s32.f32 %v46
      %49 = vadd.xlane.f32.xlu0 %v47
      %v50 = vpop.xlane.xlu0 %49
      %51 = vadd.xlane.f32.xlu0 %v48
      %v52 = vpop.xlane.xlu0 %51
      %v53 = vcvt.f32.s32 %v50
      %v54 = vcvt.f32.s32 %v52
      %v55 = vshll.u32 %v54, 16
      %v56 = vadd.s32 %v55, %v53
      %v57 = vrot.slane %v56, 4
      %v58 = vadd.s32 %v56, %v57
      %v59 = vrot.slane %v58, 2
      %v60 = vadd.s32 %v58, %v59
      %v61 = vrot.slane %v60, 1
      %v62 = vadd.s32 %v60, %v61
      %s63 = vtos %v62
      %v64 = vstv %s63
      %vm65 = vcmask 0
      %66 = vst.msk [vmem:[#allocation2] sm:$0x1] %vm65, %v64
    $region13: #{tpu_custom_call.1} parent=1 // pred_fallthru
      _
    %p67 = scmp.eq.s32.totalorder 0, 0
    // Predicated region
    $region14: #{tpu_custom_call.1} parent=1 // pred_check
      %p68 = pneg %p67
    $region15: #{tpu_custom_call.1} parent=1 // pred_check_branch
      %70 = sbr.rel (%p68) target = $region17
    $region16: #{tpu_custom_call.1} parent=1 // pred_region
      %v71 = vlaneseq
      %v72 = vshrl.u32 %v71, 7
      %s73 = smul.u32 0, 8
      %v74 = vstv %s73
      %v75 = vadd.s32 %v74, %v72
      %vm76 = vcmp.lt.s32.totalorder %v75, 8
      %vm77 = vmand %vm37, %vm76
      %v78 = vsel %vm77, 1, 0
      %vm79 = vcmask 7168
      %v80 = vsel %vm79, %v78, 0
      %v81 = vand.u32 %v80, 65535
      %v82 = vshrl.u32 %v80, 16
      %v83 = vcvt.s32.f32 %v81
      %v84 = vcvt.s32.f32 %v82
      %85 = vadd.xlane.f32.xlu0 %v83
      %v86 = vpop.xlane.xlu0 %85
      %87 = vadd.xlane.f32.xlu0 %v84
      %v88 = vpop.xlane.xlu0 %87
      %v89 = vcvt.f32.s32 %v86
      %v90 = vcvt.f32.s32 %v88
      %v91 = vshll.u32 %v90, 16
      %v92 = vadd.s32 %v91, %v89
      %v93 = vrot.slane %v92, 4
      %v94 = vadd.s32 %v92, %v93
      %v95 = vrot.slane %v94, 2
      %v96 = vadd.s32 %v94, %v95
      %v97 = vrot.slane %v96, 1
      %v98 = vadd.s32 %v96, %v97
      %s99 = vtos %v98
      %v100 = vstv %s99
      %vm101 = vcmask 0
      %102 = vst.msk [vmem:[#allocation2] sm:$0x1] %vm101, %v100
    $region17: #{tpu_custom_call.1} parent=1 // pred_fallthru
      _
    // Predicated region
    $region18: #{tpu_custom_call.1} parent=1 // pred_check
      _
    $region19: #{tpu_custom_call.1} parent=1 // pred_check_branch
      %104 = sbr.rel (0) target = $region21
    $region20: #{tpu_custom_call.1} parent=1 // pred_region
      %106 = vsyncadd [#allocation3], 0
      %s108 = sshll.u32 [#allocation2], 4
      %s109 = int_to_ptr.vmem [resolvable:$true] %s108
      %s110 = sshll.u32 %s2, 4
      %s111 = int_to_ptr.hbm [resolvable:$true] %s110
      %113 = dma.vmem_to_hbm [thread:$0]  %s109, 16, %s111, [#allocation3]
    $region21: #{tpu_custom_call.1} parent=1 // pred_fallthru
      _
    // Predicated region
    $region22: #{tpu_custom_call.1} parent=1 // pred_check
      _
    $region23: #{tpu_custom_call.1} parent=1 // pred_check_branch
      %115 = sbr.rel (0) target = $region25
    $region24: #{tpu_custom_call.1} parent=1 // pred_region
      %117 = dma.done [#allocation3], 16
    $region25: #{tpu_custom_call.1} parent=1 // pred_fallthru
      _
    %118 = vsyncpa [#allocation3], 1

</llo_original>
